<compile_context>
chip_gen: v7x
topology: tpu7x:2x2x1
jax: 0.10.0
libtpu: 0.0.40
codegen_flags: <defaults>
</compile_context>

<pallas_src>
import functools

import jax
import jax.numpy as jnp
from jax.experimental import pallas as pl
from jax.experimental.pallas import tpu as pltpu


def _round_up(n, m):
    return ((n + m - 1) // m) * m


# ------------------------------ kernel ------------------------------------- #

def policy_mlp_kernel(x_ref, w1_ref, b1_ref, w2_ref, b2_ref, w3_ref, b3_ref,
                      out_ref):
    """Fused 3-layer MLP: (Linear -> ReLU) x2 -> Linear (padded action head).

    All operands are f32; every jnp.dot accumulates in f32 on the MXU.
    The action head is zero-padded to 128 lanes (unmasked vst); padded columns
    are exactly zero-weight / zero-bias so they carry no information.
    """
    x = x_ref[...]
    h1 = jnp.dot(x, w1_ref[...], preferred_element_type=jnp.float32)
    h1 = jnp.maximum(h1 + b1_ref[...], 0.0)
    h2 = jnp.dot(h1, w2_ref[...], preferred_element_type=jnp.float32)
    h2 = jnp.maximum(h2 + b2_ref[...], 0.0)
    logits = jnp.dot(h2, w3_ref[...], preferred_element_type=jnp.float32)
    out_ref[...] = logits + b3_ref[...]


# --------------------------- parameter prep -------------------------------- #

def prepare_params(params):
    """One-time prep: f32 cast, bias reshape to (1, H), action head padded to a
    lane-dense multiple of 128.  Call once; reuse the result every forward."""
    act_dim = params["w3"].shape[1]
    head = _round_up(act_dim, 128)
    h2 = params["w3"].shape[0]

    w3 = jnp.zeros((h2, head), jnp.float32)
    w3 = w3.at[:, :act_dim].set(params["w3"].astype(jnp.float32))
    b3 = jnp.zeros((1, head), jnp.float32)
    b3 = b3.at[:, :act_dim].set(
        params["b3"].reshape(1, -1).astype(jnp.float32))

    prepped = {
        "w1": params["w1"].astype(jnp.float32),
        "b1": params["b1"].reshape(1, -1).astype(jnp.float32),
        "w2": params["w2"].astype(jnp.float32),
        "b2": params["b2"].reshape(1, -1).astype(jnp.float32),
        "w3": w3,
        "b3": b3,
    }
    return prepped, act_dim


# ------------------------------ forward ------------------------------------ #

_SPLIT_THRESHOLD = 2048   # above this many rows, split 2-ways (v7x megacore)


def _choose_tile(batch, max_tile):
    """Tile-size policy: one big 16-aligned tile; 2-way split for large B so
    both v7x TensorCores get work; multi-step only past max_tile."""
    max_tile = max(16, _round_up(max_tile, 16))   # guard user-supplied values
    b16 = _round_up(batch, 16)
    if b16 <= max_tile:
        if b16 >= _SPLIT_THRESHOLD:
            tb = _round_up((b16 + 1) // 2, 16)
        else:
            tb = b16
    else:
        tb = max_tile
    b_pad = _round_up(batch, tb)
    return tb, b_pad


@functools.partial(jax.jit, static_argnames=("act_dim", "max_tile"))
def _policy_forward_jit(x, w1, b1, w2, b2, w3, b3, *, act_dim, max_tile):
    B, obs_dim = x.shape
    H1 = w1.shape[1]
    H2 = w2.shape[1]
    head = w3.shape[1]

    TB, B_pad = _choose_tile(B, max_tile)
    grid = (B_pad // TB,)

    # Pad the batch (fused into the jit; padded rows are sliced off below).
    x_p = jnp.zeros((B_pad, obs_dim), jnp.float32)
    x_p = x_p.at[:B].set(x.astype(jnp.float32))

    resident = lambda shape: pl.BlockSpec(shape, lambda i: (0, 0))

    flops = 2 * B_pad * (obs_dim * H1 + H1 * H2 + H2 * head)
    bytes_accessed = 4 * (
        x_p.size + w1.size + w2.size + w3.size
        + b1.size + b2.size + b3.size + B_pad * head)

    out = pl.pallas_call(
        policy_mlp_kernel,
        out_shape=jax.ShapeDtypeStruct((B_pad, head), jnp.float32),
        grid=grid,
        in_specs=[
            pl.BlockSpec((TB, obs_dim), lambda i: (i, 0)),
            resident(w1.shape), resident(b1.shape),
            resident(w2.shape), resident(b2.shape),
            resident(w3.shape), resident(b3.shape),
        ],
        out_specs=pl.BlockSpec((TB, head), lambda i: (i, 0)),
        compiler_params=pltpu.CompilerParams(
            dimension_semantics=("parallel",),
            vmem_limit_bytes=32 << 20),
        cost_estimate=pl.CostEstimate(
            flops=flops, transcendentals=0, bytes_accessed=bytes_accessed),
    )(x_p, w1, b1, w2, b2, w3, b3)

    return out[:B, :act_dim]


def policy_network_forward(x, prepped, act_dim, *, max_tile=4096):
    """PolicyNetwork forward pass as one Pallas kernel.

    x: (B, obs_dim) float32
    prepped: output of prepare_params (f32 weights, padded action head)
    returns logits: (B, act_dim) float32
    """
    return _policy_forward_jit(
        x, prepped["w1"], prepped["b1"], prepped["w2"], prepped["b2"],
        prepped["w3"], prepped["b3"], act_dim=act_dim, max_tile=max_tile)


# ------------------------------ init / ref --------------------------------- #

def init_params(key, obs_dim, act_dim, hidden_sizes=(128, 128)):
    """PyTorch-style uniform(-1/sqrt(fan_in), 1/sqrt(fan_in)) init, stored f32."""
    dims = [obs_dim, *hidden_sizes, act_dim]
    params = {}
    for i in range(len(dims) - 1):
        fan_in, fan_out = dims[i], dims[i + 1]
        key, kw, kb = jax.random.split(key, 3)
        bound = 1.0 / jnp.sqrt(jnp.float32(fan_in))
        params[f"w{i+1}"] = jax.random.uniform(
            kw, (fan_in, fan_out), jnp.float32, -bound, bound)
        params[f"b{i+1}"] = jax.random.uniform(
            kb, (1, fan_out), jnp.float32, -bound, bound)
    return params


def reference_forward(x, params):
    """Pure-JAX f32 reference (matches the PyTorch module)."""
    h = jnp.maximum(x @ params["w1"] + params["b1"], 0.0)
    h = jnp.maximum(h @ params["w2"] + params["b2"], 0.0)
    return h @ params["w3"] + params["b3"]


# TODO(synk): the `act()` sampling path (softmax + Categorical sample) is left
# to plain JAX on the returned logits; fusing it into the kernel epilogue would
# shrink the per-row writeback from 128 f32 lanes to one action index.


if __name__ == "__main__":
    key = jax.random.PRNGKey(0)
    k_param, k_x1, k_x2, k_x3 = jax.random.split(key, 4)

    obs_dim, act_dim = 32, 8
    hidden_sizes = (128, 128)
    params = init_params(k_param, obs_dim, act_dim, hidden_sizes)
    prepped, act_dim_p = prepare_params(params)
    assert act_dim_p == act_dim

    # Small rollout-style batch (single grid step, TB=16).
    B = 8
    x = jax.random.normal(k_x1, (B, obs_dim), jnp.float32)
    logits = jax.block_until_ready(policy_network_forward(x, prepped, act_dim))
    ref = reference_forward(x, params)
    assert logits.shape == (B, act_dim)
    assert jnp.allclose(logits, ref, atol=1e-4, rtol=1e-4), (
        float(jnp.max(jnp.abs(logits - ref))))

    # Batch that exercises the multi-step path (max_tile=128 -> 3 grid steps).
    B2 = 260
    x2 = jax.random.normal(k_x2, (B2, obs_dim), jnp.float32)
    logits2 = jax.block_until_ready(
        policy_network_forward(x2, prepped, act_dim, max_tile=128))
    ref2 = reference_forward(x2, params)
    assert logits2.shape == (B2, act_dim)
    assert jnp.allclose(logits2, ref2, atol=1e-4, rtol=1e-4), (
        float(jnp.max(jnp.abs(logits2 - ref2))))

    # Training-sized batch that exercises the 2-way split (TB=1152, 2 steps).
    B3 = 2304
    x3 = jax.random.normal(k_x3, (B3, obs_dim), jnp.float32)
    logits3 = jax.block_until_ready(policy_network_forward(x3, prepped, act_dim))
    ref3 = reference_forward(x3, params)
    assert logits3.shape == (B3, act_dim)
    assert jnp.allclose(logits3, ref3, atol=1e-4, rtol=1e-4), (
        float(jnp.max(jnp.abs(logits3 - ref3))))

    print("KERNEL_OK")
</pallas_src>

<mosaic_0001>
module attributes {stable_mosaic.version = 11 : i64} {
  func.func @policy_mlp_kernel(%arg0: i32, %arg1: memref<16x32xf32, #tpu.memory_space<vmem>>, %arg2: memref<32x128xf32, #tpu.memory_space<vmem>>, %arg3: memref<1x128xf32, #tpu.memory_space<vmem>>, %arg4: memref<128x128xf32, #tpu.memory_space<vmem>>, %arg5: memref<1x128xf32, #tpu.memory_space<vmem>>, %arg6: memref<128x128xf32, #tpu.memory_space<vmem>>, %arg7: memref<1x128xf32, #tpu.memory_space<vmem>>, %arg8: memref<16x128xf32, #tpu.memory_space<vmem>>) attributes {dimension_semantics = [#tpu.dimension_semantics<parallel>], iteration_bounds = array<i64: 1>, scalar_prefetch = 0 : i64, scratch_operands = 0 : i64, tpu.core_type = #tpu.core_type<tc>, window_params = [{transform_indices = @transform_0, window_bounds = array<i64: 16, 32>}, {pipeline_mode = #tpu.pipeline_mode<synchronous>, transform_indices = @transform_1, window_bounds = array<i64: 32, 128>}, {pipeline_mode = #tpu.pipeline_mode<synchronous>, transform_indices = @transform_2, window_bounds = array<i64: 1, 128>}, {pipeline_mode = #tpu.pipeline_mode<synchronous>, transform_indices = @transform_3, window_bounds = array<i64: 128, 128>}, {pipeline_mode = #tpu.pipeline_mode<synchronous>, transform_indices = @transform_4, window_bounds = array<i64: 1, 128>}, {pipeline_mode = #tpu.pipeline_mode<synchronous>, transform_indices = @transform_5, window_bounds = array<i64: 128, 128>}, {pipeline_mode = #tpu.pipeline_mode<synchronous>, transform_indices = @transform_6, window_bounds = array<i64: 1, 128>}, {transform_indices = @transform_7, window_bounds = array<i64: 16, 128>}]} {
    %c0 = arith.constant 0 : index
    %c0_0 = arith.constant 0 : index
    %0 = vector.load %arg1[%c0, %c0_0] : memref<16x32xf32, #tpu.memory_space<vmem>>, vector<16x32xf32>
    %c0_1 = arith.constant 0 : index
    %c0_2 = arith.constant 0 : index
    %1 = vector.load %arg2[%c0_1, %c0_2] : memref<32x128xf32, #tpu.memory_space<vmem>>, vector<32x128xf32>
    %cst = arith.constant dense<0.000000e+00> : vector<16x128xf32>
    %2 = tpu.matmul %0, %1, %cst {dimension_numbers = #tpu.dot_dimension_numbers<[1], [0], [0], [1], [0, 0, 1, 1], [], []>} : vector<16x32xf32>, vector<32x128xf32>, vector<16x128xf32> -> vector<16x128xf32>
    %c0_3 = arith.constant 0 : index
    %c0_4 = arith.constant 0 : index
    %3 = vector.load %arg3[%c0_3, %c0_4] : memref<1x128xf32, #tpu.memory_space<vmem>>, vector<1x128xf32>
    %4 = vector.broadcast %3 : vector<1x128xf32> to vector<16x128xf32>
    %5 = arith.addf %2, %4 : vector<16x128xf32>
    %cst_5 = arith.constant 0.000000e+00 : f32
    %6 = vector.broadcast %cst_5 : f32 to vector<16x128xf32>
    %7 = arith.maximumf %5, %6 : vector<16x128xf32>
    %c0_6 = arith.constant 0 : index
    %c0_7 = arith.constant 0 : index
    %8 = vector.load %arg4[%c0_6, %c0_7] : memref<128x128xf32, #tpu.memory_space<vmem>>, vector<128x128xf32>
    %cst_8 = arith.constant dense<0.000000e+00> : vector<16x128xf32>
    %9 = tpu.matmul %7, %8, %cst_8 {dimension_numbers = #tpu.dot_dimension_numbers<[1], [0], [0], [1], [0, 0, 1, 1], [], []>} : vector<16x128xf32>, vector<128x128xf32>, vector<16x128xf32> -> vector<16x128xf32>
    %c0_9 = arith.constant 0 : index
    %c0_10 = arith.constant 0 : index
    %10 = vector.load %arg5[%c0_9, %c0_10] : memref<1x128xf32, #tpu.memory_space<vmem>>, vector<1x128xf32>
    %11 = vector.broadcast %10 : vector<1x128xf32> to vector<16x128xf32>
    %12 = arith.addf %9, %11 : vector<16x128xf32>
    %cst_11 = arith.constant 0.000000e+00 : f32
    %13 = vector.broadcast %cst_11 : f32 to vector<16x128xf32>
    %14 = arith.maximumf %12, %13 : vector<16x128xf32>
    %c0_12 = arith.constant 0 : index
    %c0_13 = arith.constant 0 : index
    %15 = vector.load %arg6[%c0_12, %c0_13] : memref<128x128xf32, #tpu.memory_space<vmem>>, vector<128x128xf32>
    %cst_14 = arith.constant dense<0.000000e+00> : vector<16x128xf32>
    %16 = tpu.matmul %14, %15, %cst_14 {dimension_numbers = #tpu.dot_dimension_numbers<[1], [0], [0], [1], [0, 0, 1, 1], [], []>} : vector<16x128xf32>, vector<128x128xf32>, vector<16x128xf32> -> vector<16x128xf32>
    %c0_15 = arith.constant 0 : index
    %c0_16 = arith.constant 0 : index
    %17 = vector.load %arg7[%c0_15, %c0_16] : memref<1x128xf32, #tpu.memory_space<vmem>>, vector<1x128xf32>
    %18 = vector.broadcast %17 : vector<1x128xf32> to vector<16x128xf32>
    %19 = arith.addf %16, %18 : vector<16x128xf32>
    %c0_17 = arith.constant 0 : index
    %c0_18 = arith.constant 0 : index
    %20 = vector.load %arg8[%c0_17, %c0_18] : memref<16x128xf32, #tpu.memory_space<vmem>>, vector<16x128xf32>
    tpu.vector_store %arg8[%c0_17, %c0_18], %19 {strides = array<i32>} : memref<16x128xf32, #tpu.memory_space<vmem>>, vector<16x128xf32>,
    return
  }
  func.func @transform_0(%arg0: i32) -> (i32, i32) {
    %c0_i32 = arith.constant 0 : i32
    %c0_i32_0 = arith.constant 0 : i32
    return %arg0, %c0_i32 : i32, i32
  }
  func.func @transform_1(%arg0: i32) -> (i32, i32) {
    %c0_i32 = arith.constant 0 : i32
    %c0_i32_0 = arith.constant 0 : i32
    %c0_i32_1 = arith.constant 0 : i32
    return %c0_i32, %c0_i32_0 : i32, i32
  }
  func.func @transform_2(%arg0: i32) -> (i32, i32) {
    %c0_i32 = arith.constant 0 : i32
    %c0_i32_0 = arith.constant 0 : i32
    %c0_i32_1 = arith.constant 0 : i32
    return %c0_i32, %c0_i32_0 : i32, i32
  }
  func.func @transform_3(%arg0: i32) -> (i32, i32) {
    %c0_i32 = arith.constant 0 : i32
    %c0_i32_0 = arith.constant 0 : i32
    %c0_i32_1 = arith.constant 0 : i32
    return %c0_i32, %c0_i32_0 : i32, i32
  }
  func.func @transform_4(%arg0: i32) -> (i32, i32) {
    %c0_i32 = arith.constant 0 : i32
    %c0_i32_0 = arith.constant 0 : i32
    %c0_i32_1 = arith.constant 0 : i32
    return %c0_i32, %c0_i32_0 : i32, i32
  }
  func.func @transform_5(%arg0: i32) -> (i32, i32) {
    %c0_i32 = arith.constant 0 : i32
    %c0_i32_0 = arith.constant 0 : i32
    %c0_i32_1 = arith.constant 0 : i32
    return %c0_i32, %c0_i32_0 : i32, i32
  }
  func.func @transform_6(%arg0: i32) -> (i32, i32) {
    %c0_i32 = arith.constant 0 : i32
    %c0_i32_0 = arith.constant 0 : i32
    %c0_i32_1 = arith.constant 0 : i32
    return %c0_i32, %c0_i32_0 : i32, i32
  }
  func.func @transform_7(%arg0: i32) -> (i32, i32) {
    %c0_i32 = arith.constant 0 : i32
    %c0_i32_0 = arith.constant 0 : i32
    return %arg0, %c0_i32 : i32, i32
  }
}

</mosaic_0001>

<llo_original>
// kernel: _policy_forward_jit.1
$region0: #{_policy_forward_jit.1}
  #allocation0 [shape = 'u32[]', space=smem, size = 0x4, offset = 0x4, fixed_abs, tag = 'smem constant byte address 0x4 - core index']
  #allocation1 [shape = 'u32[144,128]{1,0:T(1,128)}', space=vmem, size = 0x12000, scoped, tag = 'internal scratch']
  %s0 = inlined_call_operand.vmem [shape: f32[16,32], index: 0, kind: input, shape index: {}]
  %s1 = inlined_call_operand.hbm [shape: f32[32,128], index: 1, kind: input, shape index: {}]
  %s2 = inlined_call_operand.vmem [shape: f32[1,128], index: 2, kind: input, shape index: {}]
  %s3 = inlined_call_operand.hbm [shape: f32[128,128], index: 3, kind: input, shape index: {}]
  %s4 = inlined_call_operand.vmem [shape: f32[1,128], index: 4, kind: input, shape index: {}]
  %s5 = inlined_call_operand.hbm [shape: f32[128,128], index: 5, kind: input, shape index: {}]
  %s6 = inlined_call_operand.vmem [shape: f32[1,128], index: 6, kind: input, shape index: {}]
  %s7 = inlined_call_operand.vmem [shape: f32[16,128], index: 7, kind: output, shape index: {}]
  %s8 = sld [smem:[#allocation0]]
  $region50: #{_policy_forward_jit.1} parent=0
    _
  %s10 = ssub.s32 1, %s8
  %s11 = scalar_select 0, %s10, %s8
  $region1: #{_policy_forward_jit.1} parent=0
    #allocation2 [shape = 'u8[16384]{0}', space=vmem, size = 0x4000, scoped, tag = 'input window, operand 1, single buffered']
    #allocation3 [shape = 's32[1]{0}', space=sflag, size = 0x4, scoped, tag = 'scoped memory for _policy_forward_jit.1']
    #allocation4 [shape = 'u8[65536]{0}', space=vmem, size = 0x10000, scoped, tag = 'input window, operand 3, single buffered']
    #allocation5 [shape = 's32[1]{0}', space=sflag, size = 0x4, scoped, tag = 'scoped memory for _policy_forward_jit.1']
    #allocation6 [shape = 'u8[65536]{0}', space=vmem, size = 0x10000, scoped, tag = 'input window, operand 5, single buffered']
    %12 = vsyncpa [#allocation3], 0
    %13 = vsyncpa [#allocation5], 0
    // Predicated region
    $region2: #{_policy_forward_jit.1} parent=1 // pred_check
      _
    $region3: #{_policy_forward_jit.1} parent=1 // pred_check_branch
      %15 = sbr.rel (0) target = $region5
    $region4: #{_policy_forward_jit.1} parent=1 // pred_region
      _
    $region5: #{_policy_forward_jit.1} parent=1 // pred_fallthru
      _
    // Predicated region
    $region6: #{_policy_forward_jit.1} parent=1 // pred_check
      _
    $region7: #{_policy_forward_jit.1} parent=1 // pred_check_branch
      %17 = sbr.rel (0) target = $region9
    $region8: #{_policy_forward_jit.1} parent=1 // pred_region
      %s19 = ssub.s32 512, 512
      %20 = vsyncadd [#allocation3], %s19
      %s21 = sshll.u32 [#allocation2], 4
      %s22 = int_to_ptr.vmem [resolvable:$true] %s21
      %27 = dma.hbm_to_vmem [thread:$0]  %s1, 512, %s22, [#allocation3], 128, 128, 8
    $region9: #{_policy_forward_jit.1} parent=1 // pred_fallthru
      _
    // Predicated region
    $region10: #{_policy_forward_jit.1} parent=1 // pred_check
      _
    $region11: #{_policy_forward_jit.1} parent=1 // pred_check_branch
      %29 = sbr.rel (0) target = $region13
    $region12: #{_policy_forward_jit.1} parent=1 // pred_region
      _
    $region13: #{_policy_forward_jit.1} parent=1 // pred_fallthru
      _
    // Predicated region
    $region14: #{_policy_forward_jit.1} parent=1 // pred_check
      _
    $region15: #{_policy_forward_jit.1} parent=1 // pred_check_branch
      %31 = sbr.rel (0) target = $region17
    $region16: #{_policy_forward_jit.1} parent=1 // pred_region
      %s33 = ssub.s32 2048, 2048
      %34 = vsyncadd [#allocation5], %s33
      %s35 = sshll.u32 [#allocation4], 4
      %s36 = int_to_ptr.vmem [resolvable:$true] %s35
      %41 = dma.hbm_to_vmem [thread:$0]  %s3, 2048, %s36, [#allocation5], 128, 128, 8
    $region17: #{_policy_forward_jit.1} parent=1 // pred_fallthru
      _
    // Predicated region
    $region18: #{_policy_forward_jit.1} parent=1 // pred_check
      _
    $region19: #{_policy_forward_jit.1} parent=1 // pred_check_branch
      %43 = sbr.rel (0) target = $region21
    $region20: #{_policy_forward_jit.1} parent=1 // pred_region
      _
    $region21: #{_policy_forward_jit.1} parent=1 // pred_fallthru
      _
    // Predicated region
    $region22: #{_policy_forward_jit.1} parent=1 // pred_check
      _
    $region23: #{_policy_forward_jit.1} parent=1 // pred_check_branch
      %45 = sbr.rel (0) target = $region25
    $region24: #{_policy_forward_jit.1} parent=1 // pred_region
      %s47 = ssub.s32 2048, 2048
      %48 = vsyncadd [#allocation5], %s47
      %s49 = sshll.u32 [#allocation6], 4
      %s50 = int_to_ptr.vmem [resolvable:$true] %s49
      %55 = dma.hbm_to_vmem [thread:$0]  %s5, 2048, %s50, [#allocation5], 128, 128, 8
    $region25: #{_policy_forward_jit.1} parent=1 // pred_fallthru
      _
    // Predicated region
    $region26: #{_policy_forward_jit.1} parent=1 // pred_check
      _
    $region27: #{_policy_forward_jit.1} parent=1 // pred_check_branch
      %57 = sbr.rel (0) target = $region29
    $region28: #{_policy_forward_jit.1} parent=1 // pred_region
      _
    $region29: #{_policy_forward_jit.1} parent=1 // pred_fallthru
      _
    // Predicated region
    $region30: #{_policy_forward_jit.1} parent=1 // pred_check
      _
    $region31: #{_policy_forward_jit.1} parent=1 // pred_check_branch
      %59 = sbr.rel (0) target = $region33
    $region32: #{_policy_forward_jit.1} parent=1 // pred_region
      %60 = dma.done [#allocation3], 512
    $region33: #{_policy_forward_jit.1} parent=1 // pred_fallthru
      _
    // Predicated region
    $region34: #{_policy_forward_jit.1} parent=1 // pred_check
      _
    $region35: #{_policy_forward_jit.1} parent=1 // pred_check_branch
      %62 = sbr.rel (0) target = $region37
    $region36: #{_policy_forward_jit.1} parent=1 // pred_region
      %63 = dma.done [#allocation5], 2048
    $region37: #{_policy_forward_jit.1} parent=1 // pred_fallthru
      _
    // Predicated region
    $region38: #{_policy_forward_jit.1} parent=1 // pred_check
      _
    $region39: #{_policy_forward_jit.1} parent=1 // pred_check_branch
      %65 = sbr.rel (0) target = $region41
    $region40: #{_policy_forward_jit.1} parent=1 // pred_region
      %66 = dma.done [#allocation5], 2048
    $region41: #{_policy_forward_jit.1} parent=1 // pred_fallthru
      _
    %v67 = vld [vmem:[%s0] sm:$0xff]
    %v68 = vld [vmem:[%s0 + $0x8] sm:$0xff]
    %v69 = vld [vmem:[#allocation2] sm:$0xff]
    %v70 = vld [vmem:[#allocation2 + $0x8] sm:$0xff]
    %v71 = vld [vmem:[#allocation2 + $0x10] sm:$0xff]
    %v72 = vld [vmem:[#allocation2 + $0x18] sm:$0xff]
    %v73 = vld [vmem:[%s2] sm:$0x1]
    %v75 = vlaneseq
    %v76 = vshrl.u32 %v75, 7
    %v77 = vsub.s32 0, %v76
    %v78 = vrot.slane %v73, %v77
    %vm80 = vcmask 261120
    %v82 = vsel %vm80, %v67, 0
    %v85 = vsel %vm80, %v68, 0
    %87 = vmatprep.subr.mxu0 0.0
    %88 = vmatpush1.msra.mxu0 %v69
    %89 = vmatprep.subr.mxu0 0.0
    %90 = vmatpush1.msra.mxu0 %v70
    %91 = vmatprep.subr.mxu0 0.0
    %92 = vmatpush1.msra.mxu0 %v71
    %93 = vmatprep.subr.mxu0 0.0
    %94 = vmatpush1.msra.mxu0 %v72
    %95 = vmatprep.subr.mxu0 0.0
    %96 = vmatpush1.msra.mxu0 0.0
    %97 = vmatprep.subr.mxu0 0.0
    %98 = vmatpush1.msra.mxu0 0.0
    %99 = vmatprep.subr.mxu0 0.0
    %100 = vmatpush1.msra.mxu0 0.0
    %101 = vmatprep.subr.mxu0 0.0
    %102 = vmatpush1.msra.mxu0 0.0
    %103 = vmatprep.subr.mxu0 0.0
    %104 = vmatpush1.msra.mxu0 0.0
    %105 = vmatprep.subr.mxu0 0.0
    %106 = vmatpush1.msra.mxu0 0.0
    %107 = vmatprep.subr.mxu0 0.0
    %108 = vmatpush1.msra.mxu0 0.0
    %109 = vmatprep.subr.mxu0 0.0
    %110 = vmatpush1.msra.mxu0 0.0
    %111 = vmatprep.subr.mxu0 0.0
    %112 = vmatpush1.msra.mxu0 0.0
    %113 = vmatprep.subr.mxu0 0.0
    %114 = vmatpush1.msra.mxu0 0.0
    %115 = vmatprep.subr.mxu0 0.0
    %116 = vmatpush1.msra.mxu0 0.0
    %117 = vmatprep.subr.mxu0 0.0
    %118 = vmatpush1.msra.mxu0 0.0
    %119 = vmatprep.subr.mxu0 0.0
    %120 = vmatpush1.msra.mxu0 0.0
    %121 = vmatprep.subr.mxu0 0.0
    %122 = vmatpush1.msra.mxu0 0.0
    %123 = vmatprep.subr.mxu0 0.0
    %124 = vmatpush1.msra.mxu0 0.0
    %125 = vmatprep.subr.mxu0 0.0
    %126 = vmatpush1.msra.mxu0 0.0
    %127 = vmatprep.subr.mxu0 0.0
    %128 = vmatpush1.msra.mxu0 0.0
    %129 = vmatprep.subr.mxu0 0.0
    %130 = vmatpush1.msra.mxu0 0.0
    %131 = vmatprep.subr.mxu0 0.0
    %132 = vmatpush1.msra.mxu0 0.0
    %133 = vmatprep.subr.mxu0 0.0
    %134 = vmatpush1.msra.mxu0 0.0
    %135 = vmatprep.subr.mxu0 0.0
    %136 = vmatpush1.msra.mxu0 0.0
    %137 = vmatprep.subr.mxu0 0.0
    %138 = vmatpush1.msra.mxu0 0.0
    %139 = vmatprep.subr.mxu0 0.0
    %140 = vmatpush1.msra.mxu0 0.0
    %141 = vmatprep.subr.mxu0 0.0
    %142 = vmatpush1.msra.mxu0 0.0
    %143 = vmatprep.subr.mxu0 0.0
    %144 = vmatpush1.msra.mxu0 0.0
    %145 = vmatprep.subr.mxu0 0.0
    %146 = vmatpush1.msra.mxu0 0.0
    %147 = vmatprep.subr.mxu0 0.0
    %148 = vmatpush1.msra.mxu0 0.0
    %149 = vmatprep.subr.mxu0 0.0
    %150 = vmatpush1.msra.mxu0 0.0
    %151 = vmatprep.mubr.f32.mxu0 0.0
    %152 = vmatmul.mubr.f32.gmra.mrb[0].mxu0 %v82
    %v153 = vpop.f32.mrb[0].mxu0
    %v154 = vadd.f32 %v78, %v153
    %v155 = vpop.f32.mrb[0].mxu0
    %156 = vmatprep.mubr.f32.mxu0 0.0
    %157 = vmatmul.mubr.f32.gmra.mrb[0].mxu0 %v85
    %v158 = vpop.f32.mrb[0].mxu0
    %v159 = vadd.f32 %v78, %v158
    %v160 = vpop.f32.mrb[0].mxu0
    %161 = vdwg.mxu0
    %v162 = vmax.f32 %v154, 0.0
    %v163 = vmax.f32 %v159, 0.0
    %v164 = vld [vmem:[#allocation4] sm:$0xff]
    %v165 = vld [vmem:[#allocation4 + $0x8] sm:$0xff]
    %v166 = vld [vmem:[#allocation4 + $0x10] sm:$0xff]
    %v167 = vld [vmem:[#allocation4 + $0x18] sm:$0xff]
    %v168 = vld [vmem:[#allocation4 + $0x20] sm:$0xff]
    %v169 = vld [vmem:[#allocation4 + $0x28] sm:$0xff]
    %v170 = vld [vmem:[#allocation4 + $0x30] sm:$0xff]
    %v171 = vld [vmem:[#allocation4 + $0x38] sm:$0xff]
    %v172 = vld [vmem:[#allocation4 + $0x40] sm:$0xff]
    %v173 = vld [vmem:[#allocation4 + $0x48] sm:$0xff]
    %v174 = vld [vmem:[#allocation4 + $0x50] sm:$0xff]
    %v175 = vld [vmem:[#allocation4 + $0x58] sm:$0xff]
    %v176 = vld [vmem:[#allocation4 + $0x60] sm:$0xff]
    %v177 = vld [vmem:[#allocation4 + $0x68] sm:$0xff]
    %v178 = vld [vmem:[#allocation4 + $0x70] sm:$0xff]
    %v179 = vld [vmem:[#allocation4 + $0x78] sm:$0xff]
    %v180 = vld [vmem:[%s4] sm:$0x1]
    %v182 = vlaneseq
    %v183 = vshrl.u32 %v182, 7
    %v184 = vsub.s32 0, %v183
    %v185 = vrot.slane %v180, %v184
    %187 = vmatprep.subr.mxu0 0.0
    %188 = vmatpush1.msra.mxu0 %v164
    %189 = vmatprep.subr.mxu0 0.0
    %190 = vmatpush1.msra.mxu0 %v165
    %191 = vmatprep.subr.mxu0 0.0
    %192 = vmatpush1.msra.mxu0 %v166
    %193 = vmatprep.subr.mxu0 0.0
    %194 = vmatpush1.msra.mxu0 %v167
    %195 = vmatprep.subr.mxu0 0.0
    %196 = vmatpush1.msra.mxu0 %v168
    %197 = vmatprep.subr.mxu0 0.0
    %198 = vmatpush1.msra.mxu0 %v169
    %199 = vmatprep.subr.mxu0 0.0
    %200 = vmatpush1.msra.mxu0 %v170
    %201 = vmatprep.subr.mxu0 0.0
    %202 = vmatpush1.msra.mxu0 %v171
    %203 = vmatprep.subr.mxu0 0.0
    %204 = vmatpush1.msra.mxu0 %v172
    %205 = vmatprep.subr.mxu0 0.0
    %206 = vmatpush1.msra.mxu0 %v173
    %207 = vmatprep.subr.mxu0 0.0
    %208 = vmatpush1.msra.mxu0 %v174
    %209 = vmatprep.subr.mxu0 0.0
    %210 = vmatpush1.msra.mxu0 %v175
    %211 = vmatprep.subr.mxu0 0.0
    %212 = vmatpush1.msra.mxu0 %v176
    %213 = vmatprep.subr.mxu0 0.0
    %214 = vmatpush1.msra.mxu0 %v177
    %215 = vmatprep.subr.mxu0 0.0
    %216 = vmatpush1.msra.mxu0 %v178
    %217 = vmatprep.subr.mxu0 0.0
    %218 = vmatpush1.msra.mxu0 %v179
    %219 = vmatprep.subr.mxu0 0.0
    %220 = vmatpush1.msra.mxu0 0.0
    %221 = vmatprep.subr.mxu0 0.0
    %222 = vmatpush1.msra.mxu0 0.0
    %223 = vmatprep.subr.mxu0 0.0
    %224 = vmatpush1.msra.mxu0 0.0
    %225 = vmatprep.subr.mxu0 0.0
    %226 = vmatpush1.msra.mxu0 0.0
    %227 = vmatprep.subr.mxu0 0.0
    %228 = vmatpush1.msra.mxu0 0.0
    %229 = vmatprep.subr.mxu0 0.0
    %230 = vmatpush1.msra.mxu0 0.0
    %231 = vmatprep.subr.mxu0 0.0
    %232 = vmatpush1.msra.mxu0 0.0
    %233 = vmatprep.subr.mxu0 0.0
    %234 = vmatpush1.msra.mxu0 0.0
    %235 = vmatprep.subr.mxu0 0.0
    %236 = vmatpush1.msra.mxu0 0.0
    %237 = vmatprep.subr.mxu0 0.0
    %238 = vmatpush1.msra.mxu0 0.0
    %239 = vmatprep.subr.mxu0 0.0
    %240 = vmatpush1.msra.mxu0 0.0
    %241 = vmatprep.subr.mxu0 0.0
    %242 = vmatpush1.msra.mxu0 0.0
    %243 = vmatprep.subr.mxu0 0.0
    %244 = vmatpush1.msra.mxu0 0.0
    %245 = vmatprep.subr.mxu0 0.0
    %246 = vmatpush1.msra.mxu0 0.0
    %247 = vmatprep.subr.mxu0 0.0
    %248 = vmatpush1.msra.mxu0 0.0
    %249 = vmatprep.subr.mxu0 0.0
    %250 = vmatpush1.msra.mxu0 0.0
    %251 = vmatprep.mubr.f32.mxu0 0.0
    %252 = vmatmul.mubr.f32.gmra.mrb[0].mxu0 %v162
    %v253 = vpop.f32.mrb[0].mxu0
    %v254 = vadd.f32 %v185, %v253
    %v255 = vpop.f32.mrb[0].mxu0
    %256 = vmatprep.mubr.f32.mxu0 0.0
    %257 = vmatmul.mubr.f32.gmra.mrb[0].mxu0 %v163
    %v258 = vpop.f32.mrb[0].mxu0
    %v259 = vadd.f32 %v185, %v258
    %v260 = vpop.f32.mrb[0].mxu0
    %261 = vdwg.mxu0
    %v262 = vmax.f32 %v254, 0.0
    %v263 = vmax.f32 %v259, 0.0
    %v264 = vld [vmem:[#allocation6] sm:$0xff]
    %v265 = vld [vmem:[#allocation6 + $0x8] sm:$0xff]
    %v266 = vld [vmem:[#allocation6 + $0x10] sm:$0xff]
    %v267 = vld [vmem:[#allocation6 + $0x18] sm:$0xff]
    %v268 = vld [vmem:[#allocation6 + $0x20] sm:$0xff]
    %v269 = vld [vmem:[#allocation6 + $0x28] sm:$0xff]
    %v270 = vld [vmem:[#allocation6 + $0x30] sm:$0xff]
    %v271 = vld [vmem:[#allocation6 + $0x38] sm:$0xff]
    %v272 = vld [vmem:[#allocation6 + $0x40] sm:$0xff]
    %v273 = vld [vmem:[#allocation6 + $0x48] sm:$0xff]
    %v274 = vld [vmem:[#allocation6 + $0x50] sm:$0xff]
    %v275 = vld [vmem:[#allocation6 + $0x58] sm:$0xff]
    %v276 = vld [vmem:[#allocation6 + $0x60] sm:$0xff]
    %v277 = vld [vmem:[#allocation6 + $0x68] sm:$0xff]
    %v278 = vld [vmem:[#allocation6 + $0x70] sm:$0xff]
    %v279 = vld [vmem:[#allocation6 + $0x78] sm:$0xff]
    %v280 = vld [vmem:[%s6] sm:$0x1]
    %v282 = vlaneseq
    %v283 = vshrl.u32 %v282, 7
    %v284 = vsub.s32 0, %v283
    %v285 = vrot.slane %v280, %v284
    %287 = vmatprep.subr.mxu0 0.0
    %288 = vmatpush1.msra.mxu0 %v264
    %289 = vmatprep.subr.mxu0 0.0
    %290 = vmatpush1.msra.mxu0 %v265
    %291 = vmatprep.subr.mxu0 0.0
    %292 = vmatpush1.msra.mxu0 %v266
    %293 = vmatprep.subr.mxu0 0.0
    %294 = vmatpush1.msra.mxu0 %v267
    %295 = vmatprep.subr.mxu0 0.0
    %296 = vmatpush1.msra.mxu0 %v268
    %297 = vmatprep.subr.mxu0 0.0
    %298 = vmatpush1.msra.mxu0 %v269
    %299 = vmatprep.subr.mxu0 0.0
    %300 = vmatpush1.msra.mxu0 %v270
    %301 = vmatprep.subr.mxu0 0.0
    %302 = vmatpush1.msra.mxu0 %v271
    %303 = vmatprep.subr.mxu0 0.0
    %304 = vmatpush1.msra.mxu0 %v272
    %305 = vmatprep.subr.mxu0 0.0
    %306 = vmatpush1.msra.mxu0 %v273
    %307 = vmatprep.subr.mxu0 0.0
    %308 = vmatpush1.msra.mxu0 %v274
    %309 = vmatprep.subr.mxu0 0.0
    %310 = vmatpush1.msra.mxu0 %v275
    %311 = vmatprep.subr.mxu0 0.0
    %312 = vmatpush1.msra.mxu0 %v276
    %313 = vmatprep.subr.mxu0 0.0
    %314 = vmatpush1.msra.mxu0 %v277
    %315 = vmatprep.subr.mxu0 0.0
    %316 = vmatpush1.msra.mxu0 %v278
    %317 = vmatprep.subr.mxu0 0.0
    %318 = vmatpush1.msra.mxu0 %v279
    %319 = vmatprep.subr.mxu0 0.0
    %320 = vmatpush1.msra.mxu0 0.0
    %321 = vmatprep.subr.mxu0 0.0
    %322 = vmatpush1.msra.mxu0 0.0
    %323 = vmatprep.subr.mxu0 0.0
    %324 = vmatpush1.msra.mxu0 0.0
    %325 = vmatprep.subr.mxu0 0.0
    %326 = vmatpush1.msra.mxu0 0.0
    %327 = vmatprep.subr.mxu0 0.0
    %328 = vmatpush1.msra.mxu0 0.0
    %329 = vmatprep.subr.mxu0 0.0
    %330 = vmatpush1.msra.mxu0 0.0
    %331 = vmatprep.subr.mxu0 0.0
    %332 = vmatpush1.msra.mxu0 0.0
    %333 = vmatprep.subr.mxu0 0.0
    %334 = vmatpush1.msra.mxu0 0.0
    %335 = vmatprep.subr.mxu0 0.0
    %336 = vmatpush1.msra.mxu0 0.0
    %337 = vmatprep.subr.mxu0 0.0
    %338 = vmatpush1.msra.mxu0 0.0
    %339 = vmatprep.subr.mxu0 0.0
    %340 = vmatpush1.msra.mxu0 0.0
    %341 = vmatprep.subr.mxu0 0.0
    %342 = vmatpush1.msra.mxu0 0.0
    %343 = vmatprep.subr.mxu0 0.0
    %344 = vmatpush1.msra.mxu0 0.0
    %345 = vmatprep.subr.mxu0 0.0
    %346 = vmatpush1.msra.mxu0 0.0
    %347 = vmatprep.subr.mxu0 0.0
    %348 = vmatpush1.msra.mxu0 0.0
    %349 = vmatprep.subr.mxu0 0.0
    %350 = vmatpush1.msra.mxu0 0.0
    %351 = vmatprep.mubr.f32.mxu0 0.0
    %352 = vmatmul.mubr.f32.gmra.mrb[0].mxu0 %v262
    %v353 = vpop.f32.mrb[0].mxu0
    %v354 = vadd.f32 %v285, %v353
    %v355 = vpop.f32.mrb[0].mxu0
    %356 = vmatprep.mubr.f32.mxu0 0.0
    %357 = vmatmul.mubr.f32.gmra.mrb[0].mxu0 %v263
    %v358 = vpop.f32.mrb[0].mxu0
    %v359 = vadd.f32 %v285, %v358
    %v360 = vpop.f32.mrb[0].mxu0
    %361 = vdwg.mxu0
    %362 = vst [vmem:[%s7] sm:$0xff] %v354
    %363 = vst [vmem:[%s7 + $0x8] sm:$0xff] %v359
    // Predicated region
    $region42: #{_policy_forward_jit.1} parent=1 // pred_check
      _
    $region43: #{_policy_forward_jit.1} parent=1 // pred_check_branch
      %365 = sbr.rel (0) target = $region45
    $region44: #{_policy_forward_jit.1} parent=1 // pred_region
      _
    $region45: #{_policy_forward_jit.1} parent=1 // pred_fallthru
      _
    // Predicated region
    $region46: #{_policy_forward_jit.1} parent=1 // pred_check
      _
    $region47: #{_policy_forward_jit.1} parent=1 // pred_check_branch
      %367 = sbr.rel (0) target = $region49
    $region48: #{_policy_forward_jit.1} parent=1 // pred_region
      _
    $region49: #{_policy_forward_jit.1} parent=1 // pred_fallthru
      _
    %368 = vsyncpa [#allocation3], 1
    %369 = vsyncpa [#allocation5], 1

</llo_original>
